<compile_context>
chip_gen: v7x
topology: tpu7x:2x2x1
jax: 0.10.0
libtpu: 0.0.40
codegen_flags: <defaults>
</compile_context>

<pallas_src>
import math

import jax
import jax.numpy as jnp
from jax.experimental import pallas as pl
from jax.experimental.pallas import tpu as pltpu


def ffn_kernel(x_ref, w1_ref, b1_ref, w2_ref, b2_ref, o_ref):
    # x_ref : (tm, d_model)      w1_ref: (d_model, hidden)    b1_ref: (1, hidden)
    # w2_ref: (hidden, d_model)  b2_ref: (1, d_model)         o_ref : (tm, d_model)
    x = x_ref[...]                                    # native dtype straight to MXU
    h = jnp.dot(x, w1_ref[...], preferred_element_type=jnp.float32)
    h = jnp.maximum(h + b1_ref[...], 0.0)             # bias + ReLU in f32 (VPU)
    # dropout(p=0.1) in eval mode == identity
    y = jnp.dot(h.astype(x.dtype), w2_ref[...],       # back to native dtype for MXU
                preferred_element_type=jnp.float32)
    o_ref[...] = (y + b2_ref[...]).astype(o_ref.dtype)


def _pick_tile_and_vmem(M, d_model, hidden, itemsize, tm_req):
    """Choose a token-tile size and a VMEM budget that fit comfortably on v7x
    (64 MiB physical VMEM -> stay well under ~48 MiB of scoped VMEM)."""
    budget = 48 << 20  # bytes, conservative across v5e/v6e/v7x

    def usage(tm):
        weights = itemsize * (2 * d_model * hidden + hidden + d_model)
        # x and out tiles are double-buffered by the pipeline; the f32
        # intermediate (tm, hidden) lives once per iteration.
        acts = 2 * 2 * tm * d_model * itemsize + tm * hidden * 4
        return weights + acts

    tm = max(128, min(tm_req, M if M >= 128 else tm_req))
    # Shrink tm (multiples of 128) until the footprint fits the budget.
    while tm > 128 and usage(tm) > budget:
        tm -= 128
    vmem_limit = min(budget, int(usage(tm) * 1.5) + (4 << 20))
    return tm, vmem_limit


def positionwise_ffn(x, w1, b1, w2, b2, *, tm=512, vmem_limit_bytes=None):
    """x: [B, S, d_model] -> [B, S, d_model].

    tm: requested token-tile size (multiple of 128). It is automatically reduced
    if the resulting VMEM footprint would not fit on v7x's smaller VMEM.
    """
    B, S, d_model = x.shape
    hidden = w1.shape[1]
    assert w1.shape == (d_model, hidden) and w2.shape == (hidden, d_model)
    M = B * S
    itemsize = jnp.dtype(x.dtype).itemsize

    x2d = x.reshape(M, d_model)
    b1r = b1.reshape(1, hidden)
    b2r = b2.reshape(1, d_model)

    if M <= 128:
        # Single full-array token block (full-dim block satisfies the (8,128) rule).
        tm_eff, M_pad = M, M
        auto_vmem = None
    else:
        tm_eff, auto_vmem = _pick_tile_and_vmem(M, d_model, hidden, itemsize, tm)
        M_pad = pl.cdiv(M, tm_eff) * tm_eff
        if M_pad != M:
            x2d = jnp.pad(x2d, ((0, M_pad - M), (0, 0)))
    grid = (M_pad // tm_eff,)
    if vmem_limit_bytes is None:
        vmem_limit_bytes = auto_vmem

    # Advisory cost estimate so XLA schedules surrounding ops sensibly.
    flops = 4 * M * d_model * hidden                      # two matmuls, 2 flops/MAC
    bytes_accessed = itemsize * (2 * M * d_model          # x in + y out
                                 + 2 * d_model * hidden   # W1 + W2
                                 + hidden + d_model)      # biases
    cost = pl.CostEstimate(flops=flops, transcendentals=0,
                           bytes_accessed=bytes_accessed)

    out2d = pl.pallas_call(
        ffn_kernel,
        out_shape=jax.ShapeDtypeStruct((M_pad, d_model), x.dtype),
        grid_spec=pltpu.PrefetchScalarGridSpec(
            num_scalar_prefetch=0,
            grid=grid,
            in_specs=[
                pl.BlockSpec((tm_eff, d_model), lambda i: (i, 0)),   # x: tiled over tokens
                pl.BlockSpec((d_model, hidden), lambda i: (0, 0)),   # W1: VMEM-resident
                pl.BlockSpec((1, hidden),       lambda i: (0, 0)),   # b1: VMEM-resident
                pl.BlockSpec((hidden, d_model), lambda i: (0, 0)),   # W2: VMEM-resident
                pl.BlockSpec((1, d_model),      lambda i: (0, 0)),   # b2: VMEM-resident
            ],
            out_specs=pl.BlockSpec((tm_eff, d_model), lambda i: (i, 0)),
        ),
        compiler_params=pltpu.CompilerParams(
            dimension_semantics=("parallel",),          # shard token tiles on v7x's 2 TCs
            vmem_limit_bytes=vmem_limit_bytes),
        cost_estimate=cost,
    )(x2d, w1, b1r, w2, b2r)

    if M_pad != M:
        out2d = out2d[:M]
    return out2d.reshape(B, S, d_model)


def init_linear_params(key, in_features, out_features):
    """Deterministic init mimicking nn.Linear default (uniform +/- 1/sqrt(fan_in)).
    Returns weight already transposed to [in_features, out_features]."""
    kw, kb = jax.random.split(key)
    bound = 1.0 / math.sqrt(in_features)
    w = jax.random.uniform(kw, (in_features, out_features), jnp.float32,
                           minval=-bound, maxval=bound)
    b = jax.random.uniform(kb, (out_features,), jnp.float32,
                           minval=-bound, maxval=bound)
    return w, b


if __name__ == "__main__":
    # Small but lane-dense shapes (d_model multiple of 128 so stores are unmasked
    # and the MXU sees full-width operands).  M = 256 with tm=128 -> grid=(2,),
    # exercising the token-tiled, weight-resident pipeline.
    batch, seq, d_model, hidden = 2, 128, 128, 256

    key = jax.random.PRNGKey(0)
    kx, k1, k2 = jax.random.split(key, 3)

    x = jax.random.normal(kx, (batch, seq, d_model), jnp.float32)
    w1, b1 = init_linear_params(k1, d_model, hidden)   # linear1: d_model -> hidden
    w2, b2 = init_linear_params(k2, hidden, d_model)   # linear2: hidden -> d_model

    out = positionwise_ffn(x, w1, b1, w2, b2, tm=128)
    out = jax.block_until_ready(out)

    # Pure-JAX reference (dropout = identity in eval); force full-precision matmuls.
    hp = jax.lax.Precision.HIGHEST
    x2 = x.reshape(-1, d_model)
    ref_h = jnp.maximum(jnp.dot(x2, w1, precision=hp) + b1, 0.0)
    ref = (jnp.dot(ref_h, w2, precision=hp) + b2).reshape(batch, seq, d_model)

    assert out.shape == (batch, seq, d_model)
    assert jnp.allclose(out, ref, atol=1e-4, rtol=1e-4), "mismatch vs reference"

    print("KERNEL_OK")
</pallas_src>

<mosaic_0001>
module attributes {stable_mosaic.version = 11 : i64} {
  func.func @ffn_kernel(%arg0: i32, %arg1: memref<128x128xf32, #tpu.memory_space<vmem>>, %arg2: memref<128x256xf32, #tpu.memory_space<vmem>>, %arg3: memref<1x256xf32, #tpu.memory_space<vmem>>, %arg4: memref<256x128xf32, #tpu.memory_space<vmem>>, %arg5: memref<1x128xf32, #tpu.memory_space<vmem>>, %arg6: memref<128x128xf32, #tpu.memory_space<vmem>>) attributes {dimension_semantics = [#tpu.dimension_semantics<parallel>], iteration_bounds = array<i64: 2>, scalar_prefetch = 0 : i64, scratch_operands = 0 : i64, tpu.core_type = #tpu.core_type<tc>, window_params = [{transform_indices = @transform_0, window_bounds = array<i64: 128, 128>}, {pipeline_mode = #tpu.pipeline_mode<synchronous>, transform_indices = @transform_1, window_bounds = array<i64: 128, 256>}, {pipeline_mode = #tpu.pipeline_mode<synchronous>, transform_indices = @transform_2, window_bounds = array<i64: 1, 256>}, {pipeline_mode = #tpu.pipeline_mode<synchronous>, transform_indices = @transform_3, window_bounds = array<i64: 256, 128>}, {pipeline_mode = #tpu.pipeline_mode<synchronous>, transform_indices = @transform_4, window_bounds = array<i64: 1, 128>}, {transform_indices = @transform_5, window_bounds = array<i64: 128, 128>}]} {
    %c0 = arith.constant 0 : index
    %c0_0 = arith.constant 0 : index
    %0 = vector.load %arg1[%c0, %c0_0] : memref<128x128xf32, #tpu.memory_space<vmem>>, vector<128x128xf32>
    %c0_1 = arith.constant 0 : index
    %c0_2 = arith.constant 0 : index
    %1 = vector.load %arg2[%c0_1, %c0_2] : memref<128x256xf32, #tpu.memory_space<vmem>>, vector<128x256xf32>
    %cst = arith.constant dense<0.000000e+00> : vector<128x256xf32>
    %2 = tpu.matmul %0, %1, %cst {dimension_numbers = #tpu.dot_dimension_numbers<[1], [0], [0], [1], [0, 0, 1, 1], [], []>} : vector<128x128xf32>, vector<128x256xf32>, vector<128x256xf32> -> vector<128x256xf32>
    %c0_3 = arith.constant 0 : index
    %c0_4 = arith.constant 0 : index
    %3 = vector.load %arg3[%c0_3, %c0_4] : memref<1x256xf32, #tpu.memory_space<vmem>>, vector<1x256xf32>
    %4 = vector.broadcast %3 : vector<1x256xf32> to vector<128x256xf32>
    %5 = arith.addf %2, %4 : vector<128x256xf32>
    %cst_5 = arith.constant 0.000000e+00 : f32
    %6 = vector.broadcast %cst_5 : f32 to vector<128x256xf32>
    %7 = arith.maximumf %5, %6 : vector<128x256xf32>
    %c0_6 = arith.constant 0 : index
    %c0_7 = arith.constant 0 : index
    %8 = vector.load %arg4[%c0_6, %c0_7] : memref<256x128xf32, #tpu.memory_space<vmem>>, vector<256x128xf32>
    %cst_8 = arith.constant dense<0.000000e+00> : vector<128x128xf32>
    %9 = tpu.matmul %7, %8, %cst_8 {dimension_numbers = #tpu.dot_dimension_numbers<[1], [0], [0], [1], [0, 0, 1, 1], [], []>} : vector<128x256xf32>, vector<256x128xf32>, vector<128x128xf32> -> vector<128x128xf32>
    %c0_9 = arith.constant 0 : index
    %c0_10 = arith.constant 0 : index
    %10 = vector.load %arg5[%c0_9, %c0_10] : memref<1x128xf32, #tpu.memory_space<vmem>>, vector<1x128xf32>
    %11 = vector.broadcast %10 : vector<1x128xf32> to vector<128x128xf32>
    %12 = arith.addf %9, %11 : vector<128x128xf32>
    %c0_11 = arith.constant 0 : index
    %c0_12 = arith.constant 0 : index
    %13 = vector.load %arg6[%c0_11, %c0_12] : memref<128x128xf32, #tpu.memory_space<vmem>>, vector<128x128xf32>
    tpu.vector_store %arg6[%c0_11, %c0_12], %12 {strides = array<i32>} : memref<128x128xf32, #tpu.memory_space<vmem>>, vector<128x128xf32>,
    return
  }
  func.func @transform_0(%arg0: i32) -> (i32, i32) {
    %c0_i32 = arith.constant 0 : i32
    %c0_i32_0 = arith.constant 0 : i32
    return %arg0, %c0_i32 : i32, i32
  }
  func.func @transform_1(%arg0: i32) -> (i32, i32) {
    %c0_i32 = arith.constant 0 : i32
    %c0_i32_0 = arith.constant 0 : i32
    %c0_i32_1 = arith.constant 0 : i32
    return %c0_i32, %c0_i32_0 : i32, i32
  }
  func.func @transform_2(%arg0: i32) -> (i32, i32) {
    %c0_i32 = arith.constant 0 : i32
    %c0_i32_0 = arith.constant 0 : i32
    %c0_i32_1 = arith.constant 0 : i32
    return %c0_i32, %c0_i32_0 : i32, i32
  }
  func.func @transform_3(%arg0: i32) -> (i32, i32) {
    %c0_i32 = arith.constant 0 : i32
    %c0_i32_0 = arith.constant 0 : i32
    %c0_i32_1 = arith.constant 0 : i32
    return %c0_i32, %c0_i32_0 : i32, i32
  }
  func.func @transform_4(%arg0: i32) -> (i32, i32) {
    %c0_i32 = arith.constant 0 : i32
    %c0_i32_0 = arith.constant 0 : i32
    %c0_i32_1 = arith.constant 0 : i32
    return %c0_i32, %c0_i32_0 : i32, i32
  }
  func.func @transform_5(%arg0: i32) -> (i32, i32) {
    %c0_i32 = arith.constant 0 : i32
    %c0_i32_0 = arith.constant 0 : i32
    return %arg0, %c0_i32 : i32, i32
  }
}

</mosaic_0001>

<llo_original>
// kernel: tpu_custom_call.1
$region0: #{tpu_custom_call.1}
  #allocation0 [shape = 'u32[]', space=smem, size = 0x4, offset = 0x4, fixed_abs, tag = 'smem constant byte address 0x4 - core index']
  #allocation1 [shape = 'u32[144,128]{1,0:T(1,128)}', space=vmem, size = 0x12000, scoped, tag = 'internal scratch']
  %s0 = inlined_call_operand.hbm [shape: f32[256,128], index: 0, kind: input, shape index: {}]
  %s1 = inlined_call_operand.hbm [shape: f32[128,256], index: 1, kind: input, shape index: {}]
  %s2 = inlined_call_operand.vmem [shape: f32[1,256], index: 2, kind: input, shape index: {}]
  %s3 = inlined_call_operand.hbm [shape: f32[256,128], index: 3, kind: input, shape index: {}]
  %s4 = inlined_call_operand.vmem [shape: f32[1,128], index: 4, kind: input, shape index: {}]
  %s5 = inlined_call_operand.hbm [shape: f32[256,128], index: 5, kind: output, shape index: {}]
  %s6 = sld [smem:[#allocation0]]
  $region65: #{tpu_custom_call.1} parent=0
    _
  %s8 = ssub.s32 1, %s6
  %s9 = scalar_select 0, %s8, %s6
  $region1: #{tpu_custom_call.1} parent=0
    #allocation2 [shape = 'u8[131072]{0}', space=vmem, size = 0x20000, scoped, tag = 'input window, operand 0']
    #allocation3 [shape = 's32[2]{0}', space=sflag, size = 0x8, scoped, tag = 'scoped memory for tpu_custom_call.1']
    #allocation4 [shape = 's32[2]{0}', space=sflag, size = 0x8, scoped, tag = 'scoped memory for tpu_custom_call.1']
    #allocation5 [shape = 'u8[131072]{0}', space=vmem, size = 0x20000, scoped, tag = 'input window, operand 1, single buffered']
    #allocation6 [shape = 's32[1]{0}', space=sflag, size = 0x4, scoped, tag = 'scoped memory for tpu_custom_call.1']
    #allocation7 [shape = 'u8[131072]{0}', space=vmem, size = 0x20000, scoped, tag = 'input window, operand 3, single buffered']
    #allocation8 [shape = 'u8[131072]{0}', space=vmem, size = 0x20000, scoped, tag = 'output window, operand 0']
    %10 = vsyncpa [#allocation3], 0
    %s11 = scalar_lea.sflag [#allocation3], 1
    %12 = vsyncpa %s11, 0
    %13 = vsyncpa [#allocation6], 0
    %14 = vsyncpa [#allocation4], 0
    %s15 = scalar_lea.sflag [#allocation4], 1
    %16 = vsyncpa %s15, 0
    loop: start=0, step=1, limit=4
    $region2: #{tpu_custom_call.1} parent=1 // loop_pre_header
      _
    $region3: #{tpu_custom_call.1} parent=1 // loop_header
      %s18 = sphi 0, %s22
      %p19 = scmp.ge.s32.totalorder %s18, 4
      %s28 = sphi 0, %s30
      %s31 = sphi 0, %s28
      %s32 = sphi 0, %s31
      %s48 = sphi 0, %s32
      %s52 = sphi 0, %s52
      %s54 = sphi 0, %s52
      %s55 = sphi 0, %s54
      %s69 = sphi 0, %s55
      %s73 = sphi 0, %s73
      %s75 = sphi 0, %s73
      %s76 = sphi 0, %s75
      %s90 = sphi 0, %s76
      %s94 = sphi 0, %s94
      %s96 = sphi 0, %s94
      %s97 = sphi 0, %s96
      %s111 = sphi 0, %s97
      %s115 = sphi 0, %s115
      %s117 = sphi 0, %s115
      %s118 = sphi 0, %s117
      %s132 = sphi 0, %s118
      %s138 = sphi 0, %s140
      %s141 = sphi 0, %s138
      %s142 = sphi 0, %s141
      %s158 = sphi 0, %s142
    $region4: #{tpu_custom_call.1} parent=1 // loop_header_branch
      %21 = sbr.rel (%p19) target = $region8
    $region5: #{tpu_custom_call.1} parent=1 // loop_body
      %s23 = ssub.s32 %s18, 1
      %s24 = ssub.s32 %s18, 2
      %s25 = sadd.s32 %s18, 1
      %s26 = ssub.s32 %s18, %s25
      %p27 = scmp.eq.s32.totalorder %s26, 0
      %s29 = sadd.s32 %s28, 1
      %s30 = scalar_select %p27, %s28, %s29
      %p33 = pneg %p27
      %p34 = scmp.eq.s32.totalorder %s18, 1
      %p35 = por %p33, %p34
      %p36 = scmp.ne.s32.totalorder %s28, %s31
      %p37 = scmp.eq.s32.totalorder %s18, 0
      %p38 = por %p36, %p37
      %p39 = scmp.ne.s32.totalorder %s28, %s31
      %p40 = scmp.eq.s32.totalorder %s23, 1
      %p41 = por %p39, %p40
      %p42 = scmp.ne.s32.totalorder %s31, %s32
      %p43 = scmp.eq.s32.totalorder %s23, 0
      %p44 = por %p42, %p43
      %p45 = scmp.ne.s32.totalorder %s31, %s32
      %p46 = scmp.eq.s32.totalorder %s24, 1
      %p47 = por %p45, %p46
      %p49 = scmp.ne.s32.totalorder %s32, %s48
      %p50 = scmp.eq.s32.totalorder %s24, 0
      %p51 = por %p49, %p50
      %s53 = sadd.s32 %s52, 1
      %p56 = scmp.eq.s32.totalorder %s18, 1
      %p57 = scmp.ne.s32.totalorder %s52, %s54
      %p58 = scmp.eq.s32.totalorder %s18, 0
      %p59 = por %p57, %p58
      %p60 = scmp.ne.s32.totalorder %s52, %s54
      %p61 = scmp.eq.s32.totalorder %s23, 1
      %p62 = por %p60, %p61
      %p63 = scmp.ne.s32.totalorder %s54, %s55
      %p64 = scmp.eq.s32.totalorder %s23, 0
      %p65 = por %p63, %p64
      %p66 = scmp.ne.s32.totalorder %s54, %s55
      %p67 = scmp.eq.s32.totalorder %s24, 1
      %p68 = por %p66, %p67
      %p70 = scmp.ne.s32.totalorder %s55, %s69
      %p71 = scmp.eq.s32.totalorder %s24, 0
      %p72 = por %p70, %p71
      %s74 = sadd.s32 %s73, 1
      %p77 = scmp.eq.s32.totalorder %s18, 1
      %p78 = scmp.ne.s32.totalorder %s73, %s75
      %p79 = scmp.eq.s32.totalorder %s18, 0
      %p80 = por %p78, %p79
      %p81 = scmp.ne.s32.totalorder %s73, %s75
      %p82 = scmp.eq.s32.totalorder %s23, 1
      %p83 = por %p81, %p82
      %p84 = scmp.ne.s32.totalorder %s75, %s76
      %p85 = scmp.eq.s32.totalorder %s23, 0
      %p86 = por %p84, %p85
      %p87 = scmp.ne.s32.totalorder %s75, %s76
      %p88 = scmp.eq.s32.totalorder %s24, 1
      %p89 = por %p87, %p88
      %p91 = scmp.ne.s32.totalorder %s76, %s90
      %p92 = scmp.eq.s32.totalorder %s24, 0
      %p93 = por %p91, %p92
      %s95 = sadd.s32 %s94, 1
      %p98 = scmp.eq.s32.totalorder %s18, 1
      %p99 = scmp.ne.s32.totalorder %s94, %s96
      %p100 = scmp.eq.s32.totalorder %s18, 0
      %p101 = por %p99, %p100
      %p102 = scmp.ne.s32.totalorder %s94, %s96
      %p103 = scmp.eq.s32.totalorder %s23, 1
      %p104 = por %p102, %p103
      %p105 = scmp.ne.s32.totalorder %s96, %s97
      %p106 = scmp.eq.s32.totalorder %s23, 0
      %p107 = por %p105, %p106
      %p108 = scmp.ne.s32.totalorder %s96, %s97
      %p109 = scmp.eq.s32.totalorder %s24, 1
      %p110 = por %p108, %p109
      %p112 = scmp.ne.s32.totalorder %s97, %s111
      %p113 = scmp.eq.s32.totalorder %s24, 0
      %p114 = por %p112, %p113
      %s116 = sadd.s32 %s115, 1
      %p119 = scmp.eq.s32.totalorder %s18, 1
      %p120 = scmp.ne.s32.totalorder %s115, %s117
      %p121 = scmp.eq.s32.totalorder %s18, 0
      %p122 = por %p120, %p121
      %p123 = scmp.ne.s32.totalorder %s115, %s117
      %p124 = scmp.eq.s32.totalorder %s23, 1
      %p125 = por %p123, %p124
      %p126 = scmp.ne.s32.totalorder %s117, %s118
      %p127 = scmp.eq.s32.totalorder %s23, 0
      %p128 = por %p126, %p127
      %p129 = scmp.ne.s32.totalorder %s117, %s118
      %p130 = scmp.eq.s32.totalorder %s24, 1
      %p131 = por %p129, %p130
      %p133 = scmp.ne.s32.totalorder %s118, %s132
      %p134 = scmp.eq.s32.totalorder %s24, 0
      %p135 = por %p133, %p134
      %s136 = ssub.s32 %s18, %s25
      %p137 = scmp.eq.s32.totalorder %s136, 0
      %s139 = sadd.s32 %s138, 1
      %s140 = scalar_select %p137, %s138, %s139
      %p143 = pneg %p137
      %p144 = scmp.eq.s32.totalorder %s18, 1
      %p145 = por %p143, %p144
      %p146 = scmp.ne.s32.totalorder %s138, %s141
      %p147 = scmp.eq.s32.totalorder %s18, 0
      %p148 = por %p146, %p147
      %p149 = scmp.ne.s32.totalorder %s138, %s141
      %p150 = scmp.eq.s32.totalorder %s23, 1
      %p151 = por %p149, %p150
      %p152 = scmp.ne.s32.totalorder %s141, %s142
      %p153 = scmp.eq.s32.totalorder %s23, 0
      %p154 = por %p152, %p153
      %p155 = scmp.ne.s32.totalorder %s141, %s142
      %p156 = scmp.eq.s32.totalorder %s24, 1
      %p157 = por %p155, %p156
      %p159 = scmp.ne.s32.totalorder %s142, %s158
      %p160 = scmp.eq.s32.totalorder %s24, 0
      %p161 = por %p159, %p160
      %p162 = scmp.le.s32.totalorder 1, %s18
      %p163 = scmp.lt.s32.totalorder %s18, 3
      %p164 = pnand %p162, %p163
      %p165 = pneg %p164
      // Predicated region
      $region9: #{tpu_custom_call.1} parent=5 // pred_check
        _
      $region10: #{tpu_custom_call.1} parent=5 // pred_check_branch
        %167 = sbr.rel (%p164) target = $region12
      $region11: #{tpu_custom_call.1} parent=5 // pred_region
        %s168 = ssub.s32 %s18, 1
        // Predicated region
        $region13: #{tpu_custom_call.1} parent=11 // pred_check
          %p169 = pneg %p65
        $region14: #{tpu_custom_call.1} parent=11 // pred_check_branch
          %171 = sbr.rel (%p169) target = $region16
        $region15: #{tpu_custom_call.1} parent=11 // pred_region
          %s173 = ssub.s32 4096, 4096
          %174 = vsyncadd [#allocation6], %s173
          %s175 = sshll.u32 [#allocation5], 4
          %s176 = int_to_ptr.vmem [resolvable:$true] %s175
          %181 = dma.hbm_to_vmem [thread:$0]  %s1, 4096, %s176, [#allocation6], 256, 256, 16
        $region16: #{tpu_custom_call.1} parent=11 // pred_fallthru
          _
        // Predicated region
        $region17: #{tpu_custom_call.1} parent=11 // pred_check
          %p182 = pneg %p86
        $region18: #{tpu_custom_call.1} parent=11 // pred_check_branch
          %184 = sbr.rel (%p182) target = $region20
        $region19: #{tpu_custom_call.1} parent=11 // pred_region
          _
        $region20: #{tpu_custom_call.1} parent=11 // pred_fallthru
          _
        // Predicated region
        $region21: #{tpu_custom_call.1} parent=11 // pred_check
          %p185 = pneg %p107
        $region22: #{tpu_custom_call.1} parent=11 // pred_check_branch
          %187 = sbr.rel (%p185) target = $region24
        $region23: #{tpu_custom_call.1} parent=11 // pred_region
          %s189 = ssub.s32 4096, 4096
          %190 = vsyncadd [#allocation6], %s189
          %s191 = sshll.u32 [#allocation7], 4
          %s192 = int_to_ptr.vmem [resolvable:$true] %s191
          %197 = dma.hbm_to_vmem [thread:$0]  %s3, 4096, %s192, [#allocation6], 128, 128, 8
        $region24: #{tpu_custom_call.1} parent=11 // pred_fallthru
          _
        // Predicated region
        $region25: #{tpu_custom_call.1} parent=11 // pred_check
          %p198 = pneg %p128
        $region26: #{tpu_custom_call.1} parent=11 // pred_check_branch
          %200 = sbr.rel (%p198) target = $region28
        $region27: #{tpu_custom_call.1} parent=11 // pred_region
          _
        $region28: #{tpu_custom_call.1} parent=11 // pred_fallthru
          _
      $region12: #{tpu_custom_call.1} parent=5 // pred_fallthru
        _
      %p201 = scmp.lt.s32.totalorder %s18, 2
      // Predicated region
      $region29: #{tpu_custom_call.1} parent=5 // pred_check
        %p202 = pneg %p201
      $region30: #{tpu_custom_call.1} parent=5 // pred_check_branch
        %204 = sbr.rel (%p202) target = $region32
      $region31: #{tpu_custom_call.1} parent=5 // pred_region
        // Predicated region
        $region33: #{tpu_custom_call.1} parent=31 // pred_check
          %p205 = pneg %p38
        $region34: #{tpu_custom_call.1} parent=31 // pred_check_branch
          %207 = sbr.rel (%p205) target = $region36
        $region35: #{tpu_custom_call.1} parent=31 // pred_region
          %s208 = sand.u32 %s28, 1
          %s209 = scalar_lea.sflag [#allocation3], %s208
          %s210 = sand.u32 %s28, 1
          %s211 = smul.addr %s210, 128
          %s212 = scalar_lea.vmem [#allocation2], %s211
          %s213 = smul.u32 16, %s18
          %s215 = ssub.s32 2048, 2048
          %216 = vsyncadd %s209, %s215
          %s217 = smul.addr %s213, 128
          %s218 = scalar_lea.hbm %s0, %s217
          %s219 = sshll.u32 %s212, 4
          %s220 = int_to_ptr.vmem [resolvable:$true] %s219
          %225 = dma.hbm_to_vmem [thread:$0]  %s218, 2048, %s220, %s209, 128, 128, 8
        $region36: #{tpu_custom_call.1} parent=31 // pred_fallthru
          _
      $region32: #{tpu_custom_call.1} parent=5 // pred_fallthru
        _
      %p226 = scmp.le.s32.totalorder 1, %s18
      %p227 = scmp.lt.s32.totalorder %s18, 3
      %p228 = pnand %p226, %p227
      %p229 = pneg %p228
      // Predicated region
      $region37: #{tpu_custom_call.1} parent=5 // pred_check
        _
      $region38: #{tpu_custom_call.1} parent=5 // pred_check_branch
        %231 = sbr.rel (%p228) target = $region40
      $region39: #{tpu_custom_call.1} parent=5 // pred_region
        %s232 = ssub.s32 %s18, 1
        %s233 = sand.u32 %s31, 1
        %s234 = scalar_lea.sflag [#allocation3], %s233
        %s235 = sand.u32 %s31, 1
        %s236 = smul.addr %s235, 128
        %s237 = scalar_lea.vmem [#allocation2], %s236
        // Predicated region
        $region41: #{tpu_custom_call.1} parent=39 // pred_check
          %p238 = pneg %p44
        $region42: #{tpu_custom_call.1} parent=39 // pred_check_branch
          %240 = sbr.rel (%p238) target = $region44
        $region43: #{tpu_custom_call.1} parent=39 // pred_region
          %241 = dma.done %s234, 2048
        $region44: #{tpu_custom_call.1} parent=39 // pred_fallthru
          _
        // Predicated region
        $region45: #{tpu_custom_call.1} parent=39 // pred_check
          %p242 = pneg %p65
        $region46: #{tpu_custom_call.1} parent=39 // pred_check_branch
          %244 = sbr.rel (%p242) target = $region48
        $region47: #{tpu_custom_call.1} parent=39 // pred_region
          %245 = dma.done [#allocation6], 4096
        $region48: #{tpu_custom_call.1} parent=39 // pred_fallthru
          _
        // Predicated region
        $region49: #{tpu_custom_call.1} parent=39 // pred_check
          %p246 = pneg %p107
        $region50: #{tpu_custom_call.1} parent=39 // pred_check_branch
          %248 = sbr.rel (%p246) target = $region52
        $region51: #{tpu_custom_call.1} parent=39 // pred_region
          %249 = dma.done [#allocation6], 4096
        $region52: #{tpu_custom_call.1} parent=39 // pred_fallthru
          _
        %s250 = sand.u32 %s31, 1
        %s251 = scalar_lea.sflag [#allocation3], %s250
        %s252 = sand.u32 %s31, 1
        %s253 = smul.addr %s252, 128
        %s254 = scalar_lea.vmem [#allocation2], %s253
        %p255 = pneg %p44
        %p256 = pneg %p41
        %p257 = pneg %p65
        %p258 = pneg %p62
        %p259 = pneg %p86
        %p260 = pneg %p83
        %p261 = pneg %p107
        %p262 = pneg %p104
        %p263 = pneg %p128
        %p264 = pneg %p125
        %p265 = pneg %p154
        %p266 = pneg %p151
        %s267 = sand.u32 %s141, 1
        %s268 = scalar_lea.sflag [#allocation4], %s267
        %s269 = sand.u32 %s141, 1
        %s270 = smul.addr %s269, 128
        %s271 = scalar_lea.vmem [#allocation8], %s270
        %s272 = smul.u32 16, %s23
        %s273 = smul.u32 16, %s23
        %v274 = vld [vmem:[%s237] sm:$0xff]
        %v275 = vld [vmem:[%s237 + $0x8] sm:$0xff]
        %v276 = vld [vmem:[%s237 + $0x10] sm:$0xff]
        %v277 = vld [vmem:[%s237 + $0x18] sm:$0xff]
        %v278 = vld [vmem:[%s237 + $0x20] sm:$0xff]
        %v279 = vld [vmem:[%s237 + $0x28] sm:$0xff]
        %v280 = vld [vmem:[%s237 + $0x30] sm:$0xff]
        %v281 = vld [vmem:[%s237 + $0x38] sm:$0xff]
        %v282 = vld [vmem:[%s237 + $0x40] sm:$0xff]
        %v283 = vld [vmem:[%s237 + $0x48] sm:$0xff]
        %v284 = vld [vmem:[%s237 + $0x50] sm:$0xff]
        %v285 = vld [vmem:[%s237 + $0x58] sm:$0xff]
        %v286 = vld [vmem:[%s237 + $0x60] sm:$0xff]
        %v287 = vld [vmem:[%s237 + $0x68] sm:$0xff]
        %v288 = vld [vmem:[%s237 + $0x70] sm:$0xff]
        %v289 = vld [vmem:[%s237 + $0x78] sm:$0xff]
        %v290 = vld [vmem:[#allocation5] sm:$0xff]
        %v291 = vld [vmem:[#allocation5 + $0x8] sm:$0xff]
        %v292 = vld [vmem:[#allocation5 + $0x10] sm:$0xff]
        %v293 = vld [vmem:[#allocation5 + $0x18] sm:$0xff]
        %v294 = vld [vmem:[#allocation5 + $0x20] sm:$0xff]
        %v295 = vld [vmem:[#allocation5 + $0x28] sm:$0xff]
        %v296 = vld [vmem:[#allocation5 + $0x30] sm:$0xff]
        %v297 = vld [vmem:[#allocation5 + $0x38] sm:$0xff]
        %v298 = vld [vmem:[#allocation5 + $0x40] sm:$0xff]
        %v299 = vld [vmem:[#allocation5 + $0x48] sm:$0xff]
        %v300 = vld [vmem:[#allocation5 + $0x50] sm:$0xff]
        %v301 = vld [vmem:[#allocation5 + $0x58] sm:$0xff]
        %v302 = vld [vmem:[#allocation5 + $0x60] sm:$0xff]
        %v303 = vld [vmem:[#allocation5 + $0x68] sm:$0xff]
        %v304 = vld [vmem:[#allocation5 + $0x70] sm:$0xff]
        %v305 = vld [vmem:[#allocation5 + $0x78] sm:$0xff]
        %v306 = vld [vmem:[#allocation5 + $0x80] sm:$0xff]
        %v307 = vld [vmem:[#allocation5 + $0x88] sm:$0xff]
        %v308 = vld [vmem:[#allocation5 + $0x90] sm:$0xff]
        %v309 = vld [vmem:[#allocation5 + $0x98] sm:$0xff]
        %v310 = vld [vmem:[#allocation5 + $0xa0] sm:$0xff]
        %v311 = vld [vmem:[#allocation5 + $0xa8] sm:$0xff]
        %v312 = vld [vmem:[#allocation5 + $0xb0] sm:$0xff]
        %v313 = vld [vmem:[#allocation5 + $0xb8] sm:$0xff]
        %v314 = vld [vmem:[#allocation5 + $0xc0] sm:$0xff]
        %v315 = vld [vmem:[#allocation5 + $0xc8] sm:$0xff]
        %v316 = vld [vmem:[#allocation5 + $0xd0] sm:$0xff]
        %v317 = vld [vmem:[#allocation5 + $0xd8] sm:$0xff]
        %v318 = vld [vmem:[#allocation5 + $0xe0] sm:$0xff]
        %v319 = vld [vmem:[#allocation5 + $0xe8] sm:$0xff]
        %v320 = vld [vmem:[#allocation5 + $0xf0] sm:$0xff]
        %v321 = vld [vmem:[#allocation5 + $0xf8] sm:$0xff]
        %v322 = vld [vmem:[%s2] sm:$0x3]
        %v324 = vlaneseq
        %v325 = vshrl.u32 %v324, 7
        %v326 = vsub.s32 0, %v325
        %v327 = vrot.slane %v322, %v326
        %v328 = vlaneseq
        %v329 = vshrl.u32 %v328, 7
        %v330 = vsub.s32 1, %v329
        %v331 = vrot.slane %v322, %v330
        %334 = vmatprep.subr.mxu0 %v291
        %335 = vmatpush1.msra.mxu0 %v290
        %336 = vmatprep.subr.mxu0 %v293
        %337 = vmatpush1.msra.mxu0 %v292
        %338 = vmatprep.subr.mxu0 %v295
        %339 = vmatpush1.msra.mxu0 %v294
        %340 = vmatprep.subr.mxu0 %v297
        %341 = vmatpush1.msra.mxu0 %v296
        %342 = vmatprep.subr.mxu0 %v299
        %343 = vmatpush1.msra.mxu0 %v298
        %344 = vmatprep.subr.mxu0 %v301
        %345 = vmatpush1.msra.mxu0 %v300
        %346 = vmatprep.subr.mxu0 %v303
        %347 = vmatpush1.msra.mxu0 %v302
        %348 = vmatprep.subr.mxu0 %v305
        %349 = vmatpush1.msra.mxu0 %v304
        %350 = vmatprep.subr.mxu0 %v307
        %351 = vmatpush1.msra.mxu0 %v306
        %352 = vmatprep.subr.mxu0 %v309
        %353 = vmatpush1.msra.mxu0 %v308
        %354 = vmatprep.subr.mxu0 %v311
        %355 = vmatpush1.msra.mxu0 %v310
        %356 = vmatprep.subr.mxu0 %v313
        %357 = vmatpush1.msra.mxu0 %v312
        %358 = vmatprep.subr.mxu0 %v315
        %359 = vmatpush1.msra.mxu0 %v314
        %360 = vmatprep.subr.mxu0 %v317
        %361 = vmatpush1.msra.mxu0 %v316
        %362 = vmatprep.subr.mxu0 %v319
        %363 = vmatpush1.msra.mxu0 %v318
        %364 = vmatprep.subr.mxu0 %v321
        %365 = vmatpush1.msra.mxu0 %v320
        %366 = vmatprep.subr.mxu0 0.0
        %367 = vmatpush1.msra.mxu0 0.0
        %368 = vmatprep.subr.mxu0 0.0
        %369 = vmatpush1.msra.mxu0 0.0
        %370 = vmatprep.subr.mxu0 0.0
        %371 = vmatpush1.msra.mxu0 0.0
        %372 = vmatprep.subr.mxu0 0.0
        %373 = vmatpush1.msra.mxu0 0.0
        %374 = vmatprep.subr.mxu0 0.0
        %375 = vmatpush1.msra.mxu0 0.0
        %376 = vmatprep.subr.mxu0 0.0
        %377 = vmatpush1.msra.mxu0 0.0
        %378 = vmatprep.subr.mxu0 0.0
        %379 = vmatpush1.msra.mxu0 0.0
        %380 = vmatprep.subr.mxu0 0.0
        %381 = vmatpush1.msra.mxu0 0.0
        %382 = vmatprep.subr.mxu0 0.0
        %383 = vmatpush1.msra.mxu0 0.0
        %384 = vmatprep.subr.mxu0 0.0
        %385 = vmatpush1.msra.mxu0 0.0
        %386 = vmatprep.subr.mxu0 0.0
        %387 = vmatpush1.msra.mxu0 0.0
        %388 = vmatprep.subr.mxu0 0.0
        %389 = vmatpush1.msra.mxu0 0.0
        %390 = vmatprep.subr.mxu0 0.0
        %391 = vmatpush1.msra.mxu0 0.0
        %392 = vmatprep.subr.mxu0 0.0
        %393 = vmatpush1.msra.mxu0 0.0
        %394 = vmatprep.subr.mxu0 0.0
        %395 = vmatpush1.msra.mxu0 0.0
        %396 = vmatprep.subr.mxu0 0.0
        %397 = vmatpush1.msra.mxu0 0.0
        %398 = vmatprep.mubr.f32.mxu0 0.0
        %399 = vmatmul.mubr.f32.gmra.mrb[0].mxu0 %v274
        %v400 = vpop.f32.mrb[0].mxu0
        %v401 = vadd.f32 %v327, %v400
        %v402 = vpop.f32.mrb[0].mxu0
        %v403 = vadd.f32 %v331, %v402
        %404 = vmatprep.mubr.f32.mxu0 0.0
        %405 = vmatmul.mubr.f32.gmra.mrb[0].mxu0 %v275
        %v406 = vpop.f32.mrb[0].mxu0
        %v407 = vadd.f32 %v327, %v406
        %v408 = vpop.f32.mrb[0].mxu0
        %v409 = vadd.f32 %v331, %v408
        %410 = vmatprep.mubr.f32.mxu0 0.0
        %411 = vmatmul.mubr.f32.gmra.mrb[0].mxu0 %v276
        %v412 = vpop.f32.mrb[0].mxu0
        %v413 = vadd.f32 %v327, %v412
        %v414 = vpop.f32.mrb[0].mxu0
        %v415 = vadd.f32 %v331, %v414
        %416 = vmatprep.mubr.f32.mxu0 0.0
        %417 = vmatmul.mubr.f32.gmra.mrb[0].mxu0 %v277
        %v418 = vpop.f32.mrb[0].mxu0
        %v419 = vadd.f32 %v327, %v418
        %v420 = vpop.f32.mrb[0].mxu0
        %v421 = vadd.f32 %v331, %v420
        %422 = vmatprep.mubr.f32.mxu0 0.0
        %423 = vmatmul.mubr.f32.gmra.mrb[0].mxu0 %v278
        %v424 = vpop.f32.mrb[0].mxu0
        %v425 = vadd.f32 %v327, %v424
        %v426 = vpop.f32.mrb[0].mxu0
        %v427 = vadd.f32 %v331, %v426
        %428 = vmatprep.mubr.f32.mxu0 0.0
        %429 = vmatmul.mubr.f32.gmra.mrb[0].mxu0 %v279
        %v430 = vpop.f32.mrb[0].mxu0
        %v431 = vadd.f32 %v327, %v430
        %v432 = vpop.f32.mrb[0].mxu0
        %v433 = vadd.f32 %v331, %v432
        %434 = vmatprep.mubr.f32.mxu0 0.0
        %435 = vmatmul.mubr.f32.gmra.mrb[0].mxu0 %v280
        %v436 = vpop.f32.mrb[0].mxu0
        %v437 = vadd.f32 %v327, %v436
        %v438 = vpop.f32.mrb[0].mxu0
        %v439 = vadd.f32 %v331, %v438
        %440 = vmatprep.mubr.f32.mxu0 0.0
        %441 = vmatmul.mubr.f32.gmra.mrb[0].mxu0 %v281
        %v442 = vpop.f32.mrb[0].mxu0
        %v443 = vadd.f32 %v327, %v442
        %v444 = vpop.f32.mrb[0].mxu0
        %v445 = vadd.f32 %v331, %v444
        %446 = vmatprep.mubr.f32.mxu0 0.0
        %447 = vmatmul.mubr.f32.gmra.mrb[0].mxu0 %v282
        %v448 = vpop.f32.mrb[0].mxu0
        %v449 = vadd.f32 %v327, %v448
        %v450 = vpop.f32.mrb[0].mxu0
        %v451 = vadd.f32 %v331, %v450
        %452 = vmatprep.mubr.f32.mxu0 0.0
        %453 = vmatmul.mubr.f32.gmra.mrb[0].mxu0 %v283
        %v454 = vpop.f32.mrb[0].mxu0
        %v455 = vadd.f32 %v327, %v454
        %v456 = vpop.f32.mrb[0].mxu0
        %v457 = vadd.f32 %v331, %v456
        %458 = vmatprep.mubr.f32.mxu0 0.0
        %459 = vmatmul.mubr.f32.gmra.mrb[0].mxu0 %v284
        %v460 = vpop.f32.mrb[0].mxu0
        %v461 = vadd.f32 %v327, %v460
        %v462 = vpop.f32.mrb[0].mxu0
        %v463 = vadd.f32 %v331, %v462
        %464 = vmatprep.mubr.f32.mxu0 0.0
        %465 = vmatmul.mubr.f32.gmra.mrb[0].mxu0 %v285
        %v466 = vpop.f32.mrb[0].mxu0
        %v467 = vadd.f32 %v327, %v466
        %v468 = vpop.f32.mrb[0].mxu0
        %v469 = vadd.f32 %v331, %v468
        %470 = vmatprep.mubr.f32.mxu0 0.0
        %471 = vmatmul.mubr.f32.gmra.mrb[0].mxu0 %v286
        %v472 = vpop.f32.mrb[0].mxu0
        %v473 = vadd.f32 %v327, %v472
        %v474 = vpop.f32.mrb[0].mxu0
        %v475 = vadd.f32 %v331, %v474
        %476 = vmatprep.mubr.f32.mxu0 0.0
        %477 = vmatmul.mubr.f32.gmra.mrb[0].mxu0 %v287
        %v478 = vpop.f32.mrb[0].mxu0
        %v479 = vadd.f32 %v327, %v478
        %v480 = vpop.f32.mrb[0].mxu0
        %v481 = vadd.f32 %v331, %v480
        %482 = vmatprep.mubr.f32.mxu0 0.0
        %483 = vmatmul.mubr.f32.gmra.mrb[0].mxu0 %v288
        %v484 = vpop.f32.mrb[0].mxu0
        %v485 = vadd.f32 %v327, %v484
        %v486 = vpop.f32.mrb[0].mxu0
        %v487 = vadd.f32 %v331, %v486
        %488 = vmatprep.mubr.f32.mxu0 0.0
        %489 = vmatmul.mubr.f32.gmra.mrb[0].mxu0 %v289
        %v490 = vpop.f32.mrb[0].mxu0
        %v491 = vadd.f32 %v327, %v490
        %v492 = vpop.f32.mrb[0].mxu0
        %v493 = vadd.f32 %v331, %v492
        %494 = vdwg.mxu0
        %v495 = vmax.f32 %v401, 0.0
        %v496 = vmax.f32 %v403, 0.0
        %v497 = vmax.f32 %v407, 0.0
        %v498 = vmax.f32 %v409, 0.0
        %v499 = vmax.f32 %v413, 0.0
        %v500 = vmax.f32 %v415, 0.0
        %v501 = vmax.f32 %v419, 0.0
        %v502 = vmax.f32 %v421, 0.0
        %v503 = vmax.f32 %v425, 0.0
        %v504 = vmax.f32 %v427, 0.0
        %v505 = vmax.f32 %v431, 0.0
        %v506 = vmax.f32 %v433, 0.0
        %v507 = vmax.f32 %v437, 0.0
        %v508 = vmax.f32 %v439, 0.0
        %v509 = vmax.f32 %v443, 0.0
        %v510 = vmax.f32 %v445, 0.0
        %v511 = vmax.f32 %v449, 0.0
        %v512 = vmax.f32 %v451, 0.0
        %v513 = vmax.f32 %v455, 0.0
        %v514 = vmax.f32 %v457, 0.0
        %v515 = vmax.f32 %v461, 0.0
        %v516 = vmax.f32 %v463, 0.0
        %v517 = vmax.f32 %v467, 0.0
        %v518 = vmax.f32 %v469, 0.0
        %v519 = vmax.f32 %v473, 0.0
        %v520 = vmax.f32 %v475, 0.0
        %v521 = vmax.f32 %v479, 0.0
        %v522 = vmax.f32 %v481, 0.0
        %v523 = vmax.f32 %v485, 0.0
        %v524 = vmax.f32 %v487, 0.0
        %v525 = vmax.f32 %v491, 0.0
        %v526 = vmax.f32 %v493, 0.0
        %v527 = vld [vmem:[#allocation7] sm:$0xff]
        %v528 = vld [vmem:[#allocation7 + $0x8] sm:$0xff]
        %v529 = vld [vmem:[#allocation7 + $0x10] sm:$0xff]
        %v530 = vld [vmem:[#allocation7 + $0x18] sm:$0xff]
        %v531 = vld [vmem:[#allocation7 + $0x20] sm:$0xff]
        %v532 = vld [vmem:[#allocation7 + $0x28] sm:$0xff]
        %v533 = vld [vmem:[#allocation7 + $0x30] sm:$0xff]
        %v534 = vld [vmem:[#allocation7 + $0x38] sm:$0xff]
        %v535 = vld [vmem:[#allocation7 + $0x40] sm:$0xff]
        %v536 = vld [vmem:[#allocation7 + $0x48] sm:$0xff]
        %v537 = vld [vmem:[#allocation7 + $0x50] sm:$0xff]
        %v538 = vld [vmem:[#allocation7 + $0x58] sm:$0xff]
        %v539 = vld [vmem:[#allocation7 + $0x60] sm:$0xff]
        %v540 = vld [vmem:[#allocation7 + $0x68] sm:$0xff]
        %v541 = vld [vmem:[#allocation7 + $0x70] sm:$0xff]
        %v542 = vld [vmem:[#allocation7 + $0x78] sm:$0xff]
        %v543 = vld [vmem:[#allocation7 + $0x80] sm:$0xff]
        %v544 = vld [vmem:[#allocation7 + $0x88] sm:$0xff]
        %v545 = vld [vmem:[#allocation7 + $0x90] sm:$0xff]
        %v546 = vld [vmem:[#allocation7 + $0x98] sm:$0xff]
        %v547 = vld [vmem:[#allocation7 + $0xa0] sm:$0xff]
        %v548 = vld [vmem:[#allocation7 + $0xa8] sm:$0xff]
        %v549 = vld [vmem:[#allocation7 + $0xb0] sm:$0xff]
        %v550 = vld [vmem:[#allocation7 + $0xb8] sm:$0xff]
        %v551 = vld [vmem:[#allocation7 + $0xc0] sm:$0xff]
        %v552 = vld [vmem:[#allocation7 + $0xc8] sm:$0xff]
        %v553 = vld [vmem:[#allocation7 + $0xd0] sm:$0xff]
        %v554 = vld [vmem:[#allocation7 + $0xd8] sm:$0xff]
        %v555 = vld [vmem:[#allocation7 + $0xe0] sm:$0xff]
        %v556 = vld [vmem:[#allocation7 + $0xe8] sm:$0xff]
        %v557 = vld [vmem:[#allocation7 + $0xf0] sm:$0xff]
        %v558 = vld [vmem:[#allocation7 + $0xf8] sm:$0xff]
        %v559 = vld [vmem:[%s4] sm:$0x1]
        %v561 = vlaneseq
        %v562 = vshrl.u32 %v561, 7
        %v563 = vsub.s32 0, %v562
        %v564 = vrot.slane %v559, %v563
        %566 = vmatprep.subr.mxu0 0.0
        %567 = vmatpush1.msra.mxu0 %v527
        %568 = vmatprep.subr.mxu0 0.0
        %569 = vmatpush1.msra.mxu0 %v528
        %570 = vmatprep.subr.mxu0 0.0
        %571 = vmatpush1.msra.mxu0 %v529
        %572 = vmatprep.subr.mxu0 0.0
        %573 = vmatpush1.msra.mxu0 %v530
        %574 = vmatprep.subr.mxu0 0.0
        %575 = vmatpush1.msra.mxu0 %v531
        %576 = vmatprep.subr.mxu0 0.0
        %577 = vmatpush1.msra.mxu0 %v532
        %578 = vmatprep.subr.mxu0 0.0
        %579 = vmatpush1.msra.mxu0 %v533
        %580 = vmatprep.subr.mxu0 0.0
        %581 = vmatpush1.msra.mxu0 %v534
        %582 = vmatprep.subr.mxu0 0.0
        %583 = vmatpush1.msra.mxu0 %v535
        %584 = vmatprep.subr.mxu0 0.0
        %585 = vmatpush1.msra.mxu0 %v536
        %586 = vmatprep.subr.mxu0 0.0
        %587 = vmatpush1.msra.mxu0 %v537
        %588 = vmatprep.subr.mxu0 0.0
        %589 = vmatpush1.msra.mxu0 %v538
        %590 = vmatprep.subr.mxu0 0.0
        %591 = vmatpush1.msra.mxu0 %v539
        %592 = vmatprep.subr.mxu0 0.0
        %593 = vmatpush1.msra.mxu0 %v540
        %594 = vmatprep.subr.mxu0 0.0
        %595 = vmatpush1.msra.mxu0 %v541
        %596 = vmatprep.subr.mxu0 0.0
        %597 = vmatpush1.msra.mxu0 %v542
        %598 = vmatprep.subr.mxu0 0.0
        %599 = vmatpush1.msra.mxu0 %v543
        %600 = vmatprep.subr.mxu0 0.0
        %601 = vmatpush1.msra.mxu0 %v544
        %602 = vmatprep.subr.mxu0 0.0
        %603 = vmatpush1.msra.mxu0 %v545
        %604 = vmatprep.subr.mxu0 0.0
        %605 = vmatpush1.msra.mxu0 %v546
        %606 = vmatprep.subr.mxu0 0.0
        %607 = vmatpush1.msra.mxu0 %v547
        %608 = vmatprep.subr.mxu0 0.0
        %609 = vmatpush1.msra.mxu0 %v548
        %610 = vmatprep.subr.mxu0 0.0
        %611 = vmatpush1.msra.mxu0 %v549
        %612 = vmatprep.subr.mxu0 0.0
        %613 = vmatpush1.msra.mxu0 %v550
        %614 = vmatprep.subr.mxu0 0.0
        %615 = vmatpush1.msra.mxu0 %v551
        %616 = vmatprep.subr.mxu0 0.0
        %617 = vmatpush1.msra.mxu0 %v552
        %618 = vmatprep.subr.mxu0 0.0
        %619 = vmatpush1.msra.mxu0 %v553
        %620 = vmatprep.subr.mxu0 0.0
        %621 = vmatpush1.msra.mxu0 %v554
        %622 = vmatprep.subr.mxu0 0.0
        %623 = vmatpush1.msra.mxu0 %v555
        %624 = vmatprep.subr.mxu0 0.0
        %625 = vmatpush1.msra.mxu0 %v556
        %626 = vmatprep.subr.mxu0 0.0
        %627 = vmatpush1.msra.mxu0 %v557
        %628 = vmatprep.subr.mxu0 0.0
        %629 = vmatpush1.msra.mxu0 %v558
        %630 = vmatprep.mubr.f32.mxu0 %v496
        %631 = vmatmul.mubr.f32.gmra.mrb[0].mxu0 %v495
        %v632 = vpop.f32.mrb[0].mxu0
        %v633 = vadd.f32 %v564, %v632
        %v634 = vpop.f32.mrb[0].mxu0
        %635 = vmatprep.mubr.f32.mxu0 %v498
        %636 = vmatmul.mubr.f32.gmra.mrb[0].mxu0 %v497
        %v637 = vpop.f32.mrb[0].mxu0
        %v638 = vadd.f32 %v564, %v637
        %v639 = vpop.f32.mrb[0].mxu0
        %640 = vmatprep.mubr.f32.mxu0 %v500
        %641 = vmatmul.mubr.f32.gmra.mrb[0].mxu0 %v499
        %v642 = vpop.f32.mrb[0].mxu0
        %v643 = vadd.f32 %v564, %v642
        %v644 = vpop.f32.mrb[0].mxu0
        %645 = vmatprep.mubr.f32.mxu0 %v502
        %646 = vmatmul.mubr.f32.gmra.mrb[0].mxu0 %v501
        %v647 = vpop.f32.mrb[0].mxu0
        %v648 = vadd.f32 %v564, %v647
        %v649 = vpop.f32.mrb[0].mxu0
        %650 = vmatprep.mubr.f32.mxu0 %v504
        %651 = vmatmul.mubr.f32.gmra.mrb[0].mxu0 %v503
        %v652 = vpop.f32.mrb[0].mxu0
        %v653 = vadd.f32 %v564, %v652
        %v654 = vpop.f32.mrb[0].mxu0
        %655 = vmatprep.mubr.f32.mxu0 %v506
        %656 = vmatmul.mubr.f32.gmra.mrb[0].mxu0 %v505
        %v657 = vpop.f32.mrb[0].mxu0
        %v658 = vadd.f32 %v564, %v657
        %v659 = vpop.f32.mrb[0].mxu0
        %660 = vmatprep.mubr.f32.mxu0 %v508
        %661 = vmatmul.mubr.f32.gmra.mrb[0].mxu0 %v507
        %v662 = vpop.f32.mrb[0].mxu0
        %v663 = vadd.f32 %v564, %v662
        %v664 = vpop.f32.mrb[0].mxu0
        %665 = vmatprep.mubr.f32.mxu0 %v510
        %666 = vmatmul.mubr.f32.gmra.mrb[0].mxu0 %v509
        %v667 = vpop.f32.mrb[0].mxu0
        %v668 = vadd.f32 %v564, %v667
        %v669 = vpop.f32.mrb[0].mxu0
        %670 = vmatprep.mubr.f32.mxu0 %v512
        %671 = vmatmul.mubr.f32.gmra.mrb[0].mxu0 %v511
        %v672 = vpop.f32.mrb[0].mxu0
        %v673 = vadd.f32 %v564, %v672
        %v674 = vpop.f32.mrb[0].mxu0
        %675 = vmatprep.mubr.f32.mxu0 %v514
        %676 = vmatmul.mubr.f32.gmra.mrb[0].mxu0 %v513
        %v677 = vpop.f32.mrb[0].mxu0
        %v678 = vadd.f32 %v564, %v677
        %v679 = vpop.f32.mrb[0].mxu0
        %680 = vmatprep.mubr.f32.mxu0 %v516
        %681 = vmatmul.mubr.f32.gmra.mrb[0].mxu0 %v515
        %v682 = vpop.f32.mrb[0].mxu0
        %v683 = vadd.f32 %v564, %v682
        %v684 = vpop.f32.mrb[0].mxu0
        %685 = vmatprep.mubr.f32.mxu0 %v518
        %686 = vmatmul.mubr.f32.gmra.mrb[0].mxu0 %v517
        %v687 = vpop.f32.mrb[0].mxu0
        %v688 = vadd.f32 %v564, %v687
        %v689 = vpop.f32.mrb[0].mxu0
        %690 = vmatprep.mubr.f32.mxu0 %v520
        %691 = vmatmul.mubr.f32.gmra.mrb[0].mxu0 %v519
        %v692 = vpop.f32.mrb[0].mxu0
        %v693 = vadd.f32 %v564, %v692
        %v694 = vpop.f32.mrb[0].mxu0
        %695 = vmatprep.mubr.f32.mxu0 %v522
        %696 = vmatmul.mubr.f32.gmra.mrb[0].mxu0 %v521
        %v697 = vpop.f32.mrb[0].mxu0
        %v698 = vadd.f32 %v564, %v697
        %v699 = vpop.f32.mrb[0].mxu0
        %700 = vmatprep.mubr.f32.mxu0 %v524
        %701 = vmatmul.mubr.f32.gmra.mrb[0].mxu0 %v523
        %v702 = vpop.f32.mrb[0].mxu0
        %v703 = vadd.f32 %v564, %v702
        %v704 = vpop.f32.mrb[0].mxu0
        %705 = vmatprep.mubr.f32.mxu0 %v526
        %706 = vmatmul.mubr.f32.gmra.mrb[0].mxu0 %v525
        %v707 = vpop.f32.mrb[0].mxu0
        %v708 = vadd.f32 %v564, %v707
        %v709 = vpop.f32.mrb[0].mxu0
        %710 = vdwg.mxu0
        %711 = vst [vmem:[%s271] sm:$0xff] %v633
        %712 = vst [vmem:[%s271 + $0x8] sm:$0xff] %v638
        %713 = vst [vmem:[%s271 + $0x10] sm:$0xff] %v643
        %714 = vst [vmem:[%s271 + $0x18] sm:$0xff] %v648
        %715 = vst [vmem:[%s271 + $0x20] sm:$0xff] %v653
        %716 = vst [vmem:[%s271 + $0x28] sm:$0xff] %v658
        %717 = vst [vmem:[%s271 + $0x30] sm:$0xff] %v663
        %718 = vst [vmem:[%s271 + $0x38] sm:$0xff] %v668
        %719 = vst [vmem:[%s271 + $0x40] sm:$0xff] %v673
        %720 = vst [vmem:[%s271 + $0x48] sm:$0xff] %v678
        %721 = vst [vmem:[%s271 + $0x50] sm:$0xff] %v683
        %722 = vst [vmem:[%s271 + $0x58] sm:$0xff] %v688
        %723 = vst [vmem:[%s271 + $0x60] sm:$0xff] %v693
        %724 = vst [vmem:[%s271 + $0x68] sm:$0xff] %v698
        %725 = vst [vmem:[%s271 + $0x70] sm:$0xff] %v703
        %726 = vst [vmem:[%s271 + $0x78] sm:$0xff] %v708
        %s727 = sand.u32 %s141, 1
        %s728 = scalar_lea.sflag [#allocation4], %s727
        %s729 = sand.u32 %s141, 1
        %s730 = smul.addr %s729, 128
        %s731 = scalar_lea.vmem [#allocation8], %s730
        // Predicated region
        $region53: #{tpu_custom_call.1} parent=39 // pred_check
          %p732 = pneg %p151
        $region54: #{tpu_custom_call.1} parent=39 // pred_check_branch
          %734 = sbr.rel (%p732) target = $region56
        $region55: #{tpu_custom_call.1} parent=39 // pred_region
          %s735 = smul.u32 16, %s23
          %s737 = ssub.s32 2048, 2048
          %738 = vsyncadd %s728, %s737
          %s739 = smul.addr %s735, 128
          %s740 = scalar_lea.hbm %s5, %s739
          %s741 = sshll.u32 %s731, 4
          %s742 = int_to_ptr.vmem [resolvable:$true] %s741
          %747 = dma.vmem_to_hbm [thread:$0]  %s742, 2048, %s740, %s728, 128, 128, 8
        $region56: #{tpu_custom_call.1} parent=39 // pred_fallthru
          _
      $region40: #{tpu_custom_call.1} parent=5 // pred_fallthru
        _
      %p748 = scmp.le.s32.totalorder 2, %s18
      // Predicated region
      $region57: #{tpu_custom_call.1} parent=5 // pred_check
        %p749 = pneg %p748
      $region58: #{tpu_custom_call.1} parent=5 // pred_check_branch
        %751 = sbr.rel (%p749) target = $region60
      $region59: #{tpu_custom_call.1} parent=5 // pred_region
        %s752 = ssub.s32 %s18, 2
        // Predicated region
        $region61: #{tpu_custom_call.1} parent=59 // pred_check
          %p753 = pneg %p157
        $region62: #{tpu_custom_call.1} parent=59 // pred_check_branch
          %755 = sbr.rel (%p753) target = $region64
        $region63: #{tpu_custom_call.1} parent=59 // pred_region
          %s756 = sand.u32 %s142, 1
          %s757 = scalar_lea.sflag [#allocation4], %s756
          %s758 = sand.u32 %s142, 1
          %s759 = smul.addr %s758, 128
          %s760 = scalar_lea.vmem [#allocation8], %s759
          %761 = dma.done %s757, 2048
        $region64: #{tpu_custom_call.1} parent=59 // pred_fallthru
          _
      $region60: #{tpu_custom_call.1} parent=5 // pred_fallthru
        _
    $region6: #{tpu_custom_call.1} parent=1 // loop_footer
      %s22 = sadd.s32 1, %s18
    $region7: #{tpu_custom_call.1} parent=1 // loop_footer_branch
      %17 = sbr.rel target = $region3
    $region8: #{tpu_custom_call.1} parent=1 // loop_exit
      _
    %762 = vsyncpa [#allocation3], 1
    %s763 = scalar_lea.sflag [#allocation3], 1
    %764 = vsyncpa %s763, 1
    %765 = vsyncpa [#allocation6], 1
    %766 = vsyncpa [#allocation4], 1
    %s767 = scalar_lea.sflag [#allocation4], 1
    %768 = vsyncpa %s767, 1

</llo_original>
